<compile_context>
chip_gen: v5e
topology: v5e:2x2
jax: 0.10.0
libtpu: 0.0.40
codegen_flags: <defaults>
</compile_context>

<pallas_src>
import functools

import jax
import jax.numpy as jnp
from jax.experimental import pallas as pl
from jax.experimental.pallas import tpu as pltpu


def _round_up(x, m):
    return ((x + m - 1) // m) * m


def _choose_tb(batch):
    """Batch tile: multiple of 16, <= 256 rows, >= 2 grid steps when B > 16."""
    if batch <= 16:
        return 16
    half = _round_up((batch + 1) // 2, 16)   # aim for grid >= 2 (v7x dual TC)
    return min(half, 256)


# ----------------------------------------------------------------------------
# Fused MLP kernel: all layers in one kernel, activations carried in vregs.
# ----------------------------------------------------------------------------
def _mlp_body(x_ref, w0_ref, b0_ref, wh_ref, bh_ref, wo_ref, bo_ref, o_ref,
              *, n_hidden, use_bias):
    # x_ref : (TB, in_dim) f32      w0_ref: (in_dim, H_pad) bf16
    # b0_ref: (1, H_pad)   f32      wh_ref: (n_hidden, H_pad, H_pad) bf16 | None
    # bh_ref: (n_hidden, 1, H_pad) f32 | None
    # wo_ref: (H_pad, E_pad) bf16   bo_ref: (1, E_pad) f32
    # o_ref : (TB, E_pad)  f32
    x = x_ref[...].astype(jnp.bfloat16)            # cast on VPU, hidden by DMA
    h = jnp.dot(x, w0_ref[...], preferred_element_type=jnp.float32)
    if use_bias:                                   # static flag: no zero-add
        h = h + b0_ref[...]
    h = jnp.maximum(h, 0.0)

    # Hidden layers (compile-time constant count -> static unroll); activation
    # stays in registers, only a bf16 cast per layer feeds the MXU.
    for i in range(n_hidden):
        h = jnp.dot(h.astype(jnp.bfloat16), wh_ref[i],
                    preferred_element_type=jnp.float32)
        h = h + bh_ref[i]
        h = jnp.maximum(h, 0.0)

    # Output layer (no activation).
    y = jnp.dot(h.astype(jnp.bfloat16), wo_ref[...],
                preferred_element_type=jnp.float32)
    y = y + bo_ref[...]
    o_ref[...] = y.astype(o_ref.dtype)


def _make_kernel(n_hidden, use_bias):
    if n_hidden > 0:
        def kernel(x_ref, w0_ref, b0_ref, wh_ref, bh_ref, wo_ref, bo_ref, o_ref):
            _mlp_body(x_ref, w0_ref, b0_ref, wh_ref, bh_ref, wo_ref, bo_ref,
                      o_ref, n_hidden=n_hidden, use_bias=use_bias)
    else:
        def kernel(x_ref, w0_ref, b0_ref, wo_ref, bo_ref, o_ref):
            _mlp_body(x_ref, w0_ref, b0_ref, None, None, wo_ref, bo_ref,
                      o_ref, n_hidden=0, use_bias=use_bias)
    return kernel


def mlp_forward(x, packed, *, use_bias, n_hidden, embed_dim):
    """Run the whole MLP as a single fused Pallas call."""
    w0, b0, wh, bh, wo, bo = packed
    B = x.shape[0]
    xf = x.reshape(B, -1).astype(jnp.float32)      # nn.Flatten (row-major NCHW)
    in_dim = xf.shape[1]
    H_pad = w0.shape[1]
    E_pad = wo.shape[1]

    TB = _choose_tb(B)
    B_pad = _round_up(B, TB)
    if B_pad != B:                                  # tiny row-pad only
        xf = jnp.pad(xf, ((0, B_pad - B), (0, 0)))

    in_specs = [
        pl.BlockSpec((TB, in_dim), lambda i: (i, 0)),        # x tile (streamed)
        pl.BlockSpec((in_dim, H_pad), lambda i: (0, 0)),     # W0 (resident)
        pl.BlockSpec((1, H_pad), lambda i: (0, 0)),          # b0
    ]
    args = [xf, w0, b0]
    if n_hidden > 0:
        in_specs += [
            pl.BlockSpec(wh.shape, lambda i: (0, 0, 0)),     # stacked Wh
            pl.BlockSpec(bh.shape, lambda i: (0, 0, 0)),     # stacked bh
        ]
        args += [wh, bh]
    in_specs += [
        pl.BlockSpec((H_pad, E_pad), lambda i: (0, 0)),      # Wout
        pl.BlockSpec((1, E_pad), lambda i: (0, 0)),          # bout
    ]
    args += [wo, bo]

    flops = 2 * B_pad * (in_dim * H_pad + n_hidden * H_pad * H_pad
                         + H_pad * E_pad)
    bytes_accessed = (xf.size * 4 + w0.size * 2 + b0.size * 4
                      + (wh.size * 2 + bh.size * 4 if n_hidden > 0 else 0)
                      + wo.size * 2 + bo.size * 4 + B_pad * E_pad * 4)

    out = pl.pallas_call(
        _make_kernel(n_hidden, use_bias),
        out_shape=jax.ShapeDtypeStruct((B_pad, E_pad), jnp.float32),
        grid_spec=pltpu.PrefetchScalarGridSpec(
            num_scalar_prefetch=0,
            grid=(B_pad // TB,),
            in_specs=in_specs,
            out_specs=pl.BlockSpec((TB, E_pad), lambda i: (i, 0)),
        ),
        compiler_params=pltpu.CompilerParams(
            dimension_semantics=("parallel",),   # shard batch over 2 TCs (v7x)
        ),
        cost_estimate=pl.CostEstimate(flops=flops, transcendentals=0,
                                      bytes_accessed=bytes_accessed),
    )(*args)

    return out[:B, :embed_dim]


# ----------------------------------------------------------------------------
# Parameter construction (Xavier-uniform weights, zero biases), deterministic.
# ----------------------------------------------------------------------------
def xavier_uniform(key, fan_in, fan_out, dtype=jnp.float32):
    bound = (6.0 / (fan_in + fan_out)) ** 0.5
    # Stored as (in, out): transpose of PyTorch's (out, in) Linear weight.
    return jax.random.uniform(key, (fan_in, fan_out), dtype=dtype,
                              minval=-bound, maxval=bound)


def init_mlp_params(key, in_dim, hidden_dim, layers, embed_dim, use_bias):
    keys = jax.random.split(key, layers + 2)
    return {
        "w0": xavier_uniform(keys[0], in_dim, hidden_dim),
        "b0": jnp.zeros((hidden_dim,), jnp.float32),
        "whs": [xavier_uniform(keys[1 + i], hidden_dim, hidden_dim)
                for i in range(layers)],
        "bhs": [jnp.zeros((hidden_dim,), jnp.float32) for _ in range(layers)],
        "wo": xavier_uniform(keys[-1], hidden_dim, embed_dim),
        "bo": jnp.zeros((embed_dim,), jnp.float32),
    }


def pack_params(params, in_dim, hidden_dim, layers, embed_dim):
    """Zero-pad the lane (output) dims to multiples of 128, cast weights bf16.

    x stays unpadded; only weight/bias lane dims are padded, so padded math is
    exact on the real output columns (padding columns are exact zeros and ReLU
    / bias preserve them).
    """
    H_pad = _round_up(hidden_dim, 128)
    E_pad = _round_up(embed_dim, 128)

    def pad2(a, r, c):
        out = jnp.zeros((r, c), a.dtype)
        return out.at[:a.shape[0], :a.shape[1]].set(a)

    w0 = pad2(params["w0"], in_dim, H_pad).astype(jnp.bfloat16)
    b0 = pad2(params["b0"][None, :], 1, H_pad)                 # f32 epilogue
    if layers > 0:
        wh = jnp.stack([pad2(w, H_pad, H_pad) for w in params["whs"]]
                       ).astype(jnp.bfloat16)
        bh = jnp.stack([pad2(b[None, :], 1, H_pad) for b in params["bhs"]])
    else:
        wh, bh = None, None
    wo = pad2(params["wo"], H_pad, E_pad).astype(jnp.bfloat16)
    bo = pad2(params["bo"][None, :], 1, E_pad)
    return (w0, b0, wh, bh, wo, bo)


# ----------------------------------------------------------------------------
# Pure-JAX reference (same bf16 operands / f32 accumulation as the kernel).
# ----------------------------------------------------------------------------
def mlp_forward_ref(x, params, *, use_bias):
    B = x.shape[0]
    h = x.reshape(B, -1)

    def lin(h, w, b, relu):
        y = jnp.dot(h.astype(jnp.bfloat16), w.astype(jnp.bfloat16),
                    preferred_element_type=jnp.float32)
        y = y + b
        return jnp.maximum(y, 0.0) if relu else y

    b0 = params["b0"] if use_bias else jnp.zeros_like(params["b0"])
    h = lin(h, params["w0"], b0, True)
    for w, b in zip(params["whs"], params["bhs"]):
        h = lin(h, w, b, True)
    return lin(h, params["wo"], params["bo"], False)


if __name__ == "__main__":
    # Module config (PyTorch params dict); activation = nn.ReLU.
    B, C, H, W = 2, 4, 16, 16
    in_dim = C * H * W          # 1024 flattened features
    hidden_dim = 32
    layers = 2
    embed_dim = 16
    use_bias = True

    key = jax.random.PRNGKey(0)
    kx, kp = jax.random.split(key)

    x = jax.random.normal(kx, (B, C, H, W), jnp.float32)   # NCHW like PyTorch
    params = init_mlp_params(kp, in_dim, hidden_dim, layers, embed_dim, use_bias)
    packed = pack_params(params, in_dim, hidden_dim, layers, embed_dim)

    out = mlp_forward(x, packed, use_bias=use_bias, n_hidden=layers,
                      embed_dim=embed_dim)
    out = jax.block_until_ready(out)

    ref = mlp_forward_ref(x, params, use_bias=use_bias)
    assert out.shape == (B, embed_dim), out.shape
    assert jnp.allclose(out, ref, atol=1e-2, rtol=1e-2), "mismatch vs reference"

    print("KERNEL_OK")
</pallas_src>

<mosaic_0001>
module attributes {stable_mosaic.version = 11 : i64} {
  func.func @kernel(%arg0: i32, %arg1: memref<16x1024xf32, #tpu.memory_space<vmem>>, %arg2: memref<1024x128xbf16, #tpu.memory_space<vmem>>, %arg3: memref<1x128xf32, #tpu.memory_space<vmem>>, %arg4: memref<2x128x128xbf16, #tpu.memory_space<vmem>>, %arg5: memref<2x1x128xf32, #tpu.memory_space<vmem>>, %arg6: memref<128x128xbf16, #tpu.memory_space<vmem>>, %arg7: memref<1x128xf32, #tpu.memory_space<vmem>>, %arg8: memref<16x128xf32, #tpu.memory_space<vmem>>) attributes {dimension_semantics = [#tpu.dimension_semantics<parallel>], iteration_bounds = array<i64: 1>, scalar_prefetch = 0 : i64, scratch_operands = 0 : i64, tpu.core_type = #tpu.core_type<tc>, window_params = [{transform_indices = @transform_0, window_bounds = array<i64: 16, 1024>}, {pipeline_mode = #tpu.pipeline_mode<synchronous>, transform_indices = @transform_1, window_bounds = array<i64: 1024, 128>}, {pipeline_mode = #tpu.pipeline_mode<synchronous>, transform_indices = @transform_2, window_bounds = array<i64: 1, 128>}, {pipeline_mode = #tpu.pipeline_mode<synchronous>, transform_indices = @transform_3, window_bounds = array<i64: 2, 128, 128>}, {pipeline_mode = #tpu.pipeline_mode<synchronous>, transform_indices = @transform_4, window_bounds = array<i64: 2, 1, 128>}, {pipeline_mode = #tpu.pipeline_mode<synchronous>, transform_indices = @transform_5, window_bounds = array<i64: 128, 128>}, {pipeline_mode = #tpu.pipeline_mode<synchronous>, transform_indices = @transform_6, window_bounds = array<i64: 1, 128>}, {transform_indices = @transform_7, window_bounds = array<i64: 16, 128>}]} {
    %c0 = arith.constant 0 : index
    %c0_0 = arith.constant 0 : index
    %0 = vector.load %arg1[%c0, %c0_0] : memref<16x1024xf32, #tpu.memory_space<vmem>>, vector<16x1024xf32>
    %1 = arith.truncf %0 : vector<16x1024xf32> to vector<16x1024xbf16>
    %c0_1 = arith.constant 0 : index
    %c0_2 = arith.constant 0 : index
    %2 = vector.load %arg2[%c0_1, %c0_2] : memref<1024x128xbf16, #tpu.memory_space<vmem>>, vector<1024x128xbf16>
    %cst = arith.constant dense<0.000000e+00> : vector<16x128xf32>
    %3 = tpu.matmul %1, %2, %cst {dimension_numbers = #tpu.dot_dimension_numbers<[1], [0], [0], [1], [0, 0, 1, 1], [], []>} : vector<16x1024xbf16>, vector<1024x128xbf16>, vector<16x128xf32> -> vector<16x128xf32>
    %c0_3 = arith.constant 0 : index
    %c0_4 = arith.constant 0 : index
    %4 = vector.load %arg3[%c0_3, %c0_4] : memref<1x128xf32, #tpu.memory_space<vmem>>, vector<1x128xf32>
    %5 = vector.broadcast %4 : vector<1x128xf32> to vector<16x128xf32>
    %6 = arith.addf %3, %5 : vector<16x128xf32>
    %cst_5 = arith.constant 0.000000e+00 : f32
    %7 = vector.broadcast %cst_5 : f32 to vector<16x128xf32>
    %8 = arith.maximumf %6, %7 : vector<16x128xf32>
    %9 = arith.truncf %8 : vector<16x128xf32> to vector<16x128xbf16>
    %c0_6 = arith.constant 0 : index
    %c0_7 = arith.constant 0 : index
    %c0_8 = arith.constant 0 : index
    %10 = vector.load %arg4[%c0_6, %c0_7, %c0_8] : memref<2x128x128xbf16, #tpu.memory_space<vmem>>, vector<1x128x128xbf16>
    %11 = vector.shape_cast %10 : vector<1x128x128xbf16> to vector<128x128xbf16>
    %cst_9 = arith.constant dense<0.000000e+00> : vector<16x128xf32>
    %12 = tpu.matmul %9, %11, %cst_9 {dimension_numbers = #tpu.dot_dimension_numbers<[1], [0], [0], [1], [0, 0, 1, 1], [], []>} : vector<16x128xbf16>, vector<128x128xbf16>, vector<16x128xf32> -> vector<16x128xf32>
    %c0_10 = arith.constant 0 : index
    %c0_11 = arith.constant 0 : index
    %c0_12 = arith.constant 0 : index
    %13 = vector.load %arg5[%c0_10, %c0_11, %c0_12] : memref<2x1x128xf32, #tpu.memory_space<vmem>>, vector<1x1x128xf32>
    %14 = vector.shape_cast %13 : vector<1x1x128xf32> to vector<1x128xf32>
    %15 = vector.broadcast %14 : vector<1x128xf32> to vector<16x128xf32>
    %16 = arith.addf %12, %15 : vector<16x128xf32>
    %cst_13 = arith.constant 0.000000e+00 : f32
    %17 = vector.broadcast %cst_13 : f32 to vector<16x128xf32>
    %18 = arith.maximumf %16, %17 : vector<16x128xf32>
    %19 = arith.truncf %18 : vector<16x128xf32> to vector<16x128xbf16>
    %c1 = arith.constant 1 : index
    %c0_14 = arith.constant 0 : index
    %c0_15 = arith.constant 0 : index
    %20 = vector.load %arg4[%c1, %c0_14, %c0_15] : memref<2x128x128xbf16, #tpu.memory_space<vmem>>, vector<1x128x128xbf16>
    %21 = vector.shape_cast %20 : vector<1x128x128xbf16> to vector<128x128xbf16>
    %cst_16 = arith.constant dense<0.000000e+00> : vector<16x128xf32>
    %22 = tpu.matmul %19, %21, %cst_16 {dimension_numbers = #tpu.dot_dimension_numbers<[1], [0], [0], [1], [0, 0, 1, 1], [], []>} : vector<16x128xbf16>, vector<128x128xbf16>, vector<16x128xf32> -> vector<16x128xf32>
    %c1_17 = arith.constant 1 : index
    %c0_18 = arith.constant 0 : index
    %c0_19 = arith.constant 0 : index
    %23 = vector.load %arg5[%c1_17, %c0_18, %c0_19] : memref<2x1x128xf32, #tpu.memory_space<vmem>>, vector<1x1x128xf32>
    %24 = vector.shape_cast %23 : vector<1x1x128xf32> to vector<1x128xf32>
    %25 = vector.broadcast %24 : vector<1x128xf32> to vector<16x128xf32>
    %26 = arith.addf %22, %25 : vector<16x128xf32>
    %cst_20 = arith.constant 0.000000e+00 : f32
    %27 = vector.broadcast %cst_20 : f32 to vector<16x128xf32>
    %28 = arith.maximumf %26, %27 : vector<16x128xf32>
    %29 = arith.truncf %28 : vector<16x128xf32> to vector<16x128xbf16>
    %c0_21 = arith.constant 0 : index
    %c0_22 = arith.constant 0 : index
    %30 = vector.load %arg6[%c0_21, %c0_22] : memref<128x128xbf16, #tpu.memory_space<vmem>>, vector<128x128xbf16>
    %cst_23 = arith.constant dense<0.000000e+00> : vector<16x128xf32>
    %31 = tpu.matmul %29, %30, %cst_23 {dimension_numbers = #tpu.dot_dimension_numbers<[1], [0], [0], [1], [0, 0, 1, 1], [], []>} : vector<16x128xbf16>, vector<128x128xbf16>, vector<16x128xf32> -> vector<16x128xf32>
    %c0_24 = arith.constant 0 : index
    %c0_25 = arith.constant 0 : index
    %32 = vector.load %arg7[%c0_24, %c0_25] : memref<1x128xf32, #tpu.memory_space<vmem>>, vector<1x128xf32>
    %33 = vector.broadcast %32 : vector<1x128xf32> to vector<16x128xf32>
    %34 = arith.addf %31, %33 : vector<16x128xf32>
    %c0_26 = arith.constant 0 : index
    %c0_27 = arith.constant 0 : index
    %35 = vector.load %arg8[%c0_26, %c0_27] : memref<16x128xf32, #tpu.memory_space<vmem>>, vector<16x128xf32>
    tpu.vector_store %arg8[%c0_26, %c0_27], %34 {strides = array<i32>} : memref<16x128xf32, #tpu.memory_space<vmem>>, vector<16x128xf32>,
    return
  }
  func.func @transform_0(%arg0: i32) -> (i32, i32) {
    %c0_i32 = arith.constant 0 : i32
    %c0_i32_0 = arith.constant 0 : i32
    return %arg0, %c0_i32 : i32, i32
  }
  func.func @transform_1(%arg0: i32) -> (i32, i32) {
    %c0_i32 = arith.constant 0 : i32
    %c0_i32_0 = arith.constant 0 : i32
    %c0_i32_1 = arith.constant 0 : i32
    return %c0_i32, %c0_i32_0 : i32, i32
  }
  func.func @transform_2(%arg0: i32) -> (i32, i32) {
    %c0_i32 = arith.constant 0 : i32
    %c0_i32_0 = arith.constant 0 : i32
    %c0_i32_1 = arith.constant 0 : i32
    return %c0_i32, %c0_i32_0 : i32, i32
  }
  func.func @transform_3(%arg0: i32) -> (i32, i32, i32) {
    %c0_i32 = arith.constant 0 : i32
    %c0_i32_0 = arith.constant 0 : i32
    %c0_i32_1 = arith.constant 0 : i32
    %c0_i32_2 = arith.constant 0 : i32
    return %c0_i32, %c0_i32_0, %c0_i32_1 : i32, i32, i32
  }
  func.func @transform_4(%arg0: i32) -> (i32, i32, i32) {
    %c0_i32 = arith.constant 0 : i32
    %c0_i32_0 = arith.constant 0 : i32
    %c0_i32_1 = arith.constant 0 : i32
    %c0_i32_2 = arith.constant 0 : i32
    return %c0_i32, %c0_i32_0, %c0_i32_1 : i32, i32, i32
  }
  func.func @transform_5(%arg0: i32) -> (i32, i32) {
    %c0_i32 = arith.constant 0 : i32
    %c0_i32_0 = arith.constant 0 : i32
    %c0_i32_1 = arith.constant 0 : i32
    return %c0_i32, %c0_i32_0 : i32, i32
  }
  func.func @transform_6(%arg0: i32) -> (i32, i32) {
    %c0_i32 = arith.constant 0 : i32
    %c0_i32_0 = arith.constant 0 : i32
    %c0_i32_1 = arith.constant 0 : i32
    return %c0_i32, %c0_i32_0 : i32, i32
  }
  func.func @transform_7(%arg0: i32) -> (i32, i32) {
    %c0_i32 = arith.constant 0 : i32
    %c0_i32_0 = arith.constant 0 : i32
    return %arg0, %c0_i32 : i32, i32
  }
}

</mosaic_0001>

<llo_original>
// kernel: tpu_custom_call.1
$region0: #{tpu_custom_call.1}
  #allocation0 [shape = 'u32[]', space=smem, size = 0x4, offset = 0x4, fixed_abs, tag = 'smem constant byte address 0x4 - core index']
  #allocation1 [shape = 'u32[72,128]{1,0:T(1,128)}', space=vmem, size = 0x9000, scoped, tag = 'internal scratch']
  %s0 = inlined_call_operand.hbm [shape: f32[16,1024], index: 0, kind: input, shape index: {}]
  %s1 = inlined_call_operand.hbm [shape: bf16[1024,128], index: 1, kind: input, shape index: {}]
  %s2 = inlined_call_operand.vmem [shape: f32[1,128], index: 2, kind: input, shape index: {}]
  %s3 = inlined_call_operand.hbm [shape: bf16[2,128,128], index: 3, kind: input, shape index: {}]
  %s4 = inlined_call_operand.vmem [shape: f32[2,1,128], index: 4, kind: input, shape index: {}]
  %s5 = inlined_call_operand.hbm [shape: bf16[128,128], index: 5, kind: input, shape index: {}]
  %s6 = inlined_call_operand.vmem [shape: f32[1,128], index: 6, kind: input, shape index: {}]
  %s7 = inlined_call_operand.hbm [shape: f32[16,128], index: 7, kind: output, shape index: {}]
  %s8 = sld [smem:[#allocation0]]
  $region54: #{tpu_custom_call.1} parent=0
    _
  %s10 = ssub.s32 1, %s8
  %s11 = scalar_select 0, %s10, %s8
  $region1: #{tpu_custom_call.1} parent=0
    #allocation2 [shape = 'u8[65536]{0}', space=vmem, size = 0x10000, scoped, tag = 'input window, operand 0, single buffered']
    #allocation3 [shape = 's32[1]{0}', space=sflag, size = 0x4, scoped, tag = 'scoped memory for tpu_custom_call.1']
    #allocation4 [shape = 's32[1]{0}', space=sflag, size = 0x4, scoped, tag = 'scoped memory for tpu_custom_call.1']
    #allocation5 [shape = 'u8[262144]{0}', space=vmem, size = 0x40000, scoped, tag = 'input window, operand 1, single buffered']
    #allocation6 [shape = 's32[1]{0}', space=sflag, size = 0x4, scoped, tag = 'scoped memory for tpu_custom_call.1']
    #allocation7 [shape = 'u8[65536]{0}', space=vmem, size = 0x10000, scoped, tag = 'input window, operand 3, single buffered']
    #allocation8 [shape = 'u8[32768]{0}', space=vmem, size = 0x8000, scoped, tag = 'input window, operand 5, single buffered']
    #allocation9 [shape = 's32[1]{0}', space=sflag, size = 0x4, scoped, tag = 'scoped memory for tpu_custom_call.1']
    #allocation10 [shape = 'u8[8192]{0}', space=vmem, size = 0x2000, scoped, tag = 'output window, operand 0, single buffered']
    %12 = vsyncpa [#allocation3], 0
    %13 = vsyncpa [#allocation6], 0
    %14 = vsyncpa [#allocation9], 0
    %15 = vsyncpa [#allocation4], 0
    // Predicated region
    $region2: #{tpu_custom_call.1} parent=1 // pred_check
      _
    $region3: #{tpu_custom_call.1} parent=1 // pred_check_branch
      %17 = sbr.rel (0) target = $region5
    $region4: #{tpu_custom_call.1} parent=1 // pred_region
      %19 = vsyncadd [#allocation3], 0
      %s20 = sshll.u32 %s0, 4
      %s21 = int_to_ptr.hbm [resolvable:$true] %s20
      %s22 = sshll.u32 [#allocation2], 4
      %s23 = int_to_ptr.vmem [resolvable:$true] %s22
      %28 = dma.hbm_to_vmem [thread:$0]  %s21, 2048, %s23, [#allocation3], 1024, 1024, 64
    $region5: #{tpu_custom_call.1} parent=1 // pred_fallthru
      _
    // Predicated region
    $region6: #{tpu_custom_call.1} parent=1 // pred_check
      _
    $region7: #{tpu_custom_call.1} parent=1 // pred_check_branch
      %30 = sbr.rel (0) target = $region9
    $region8: #{tpu_custom_call.1} parent=1 // pred_region
      %32 = vsyncadd [#allocation6], 0
      %s33 = sshll.u32 %s1, 4
      %s34 = int_to_ptr.hbm [resolvable:$true] %s33
      %s35 = sshll.u32 [#allocation5], 4
      %s36 = int_to_ptr.vmem [resolvable:$true] %s35
      %41 = dma.hbm_to_vmem [thread:$0]  %s34, 8192, %s36, [#allocation6], 64, 64, 4
    $region9: #{tpu_custom_call.1} parent=1 // pred_fallthru
      _
    // Predicated region
    $region10: #{tpu_custom_call.1} parent=1 // pred_check
      _
    $region11: #{tpu_custom_call.1} parent=1 // pred_check_branch
      %43 = sbr.rel (0) target = $region13
    $region12: #{tpu_custom_call.1} parent=1 // pred_region
      _
    $region13: #{tpu_custom_call.1} parent=1 // pred_fallthru
      _
    // Predicated region
    $region14: #{tpu_custom_call.1} parent=1 // pred_check
      _
    $region15: #{tpu_custom_call.1} parent=1 // pred_check_branch
      %45 = sbr.rel (0) target = $region17
    $region16: #{tpu_custom_call.1} parent=1 // pred_region
      %47 = vsyncadd [#allocation6], 0
      %s48 = sshll.u32 %s3, 4
      %s49 = int_to_ptr.hbm [resolvable:$true] %s48
      %s50 = sshll.u32 [#allocation7], 4
      %s51 = int_to_ptr.vmem [resolvable:$true] %s50
      %56 = dma.hbm_to_vmem [thread:$0]  %s49, 2048, %s51, [#allocation6], 64, 64, 4
    $region17: #{tpu_custom_call.1} parent=1 // pred_fallthru
      _
    // Predicated region
    $region18: #{tpu_custom_call.1} parent=1 // pred_check
      _
    $region19: #{tpu_custom_call.1} parent=1 // pred_check_branch
      %58 = sbr.rel (0) target = $region21
    $region20: #{tpu_custom_call.1} parent=1 // pred_region
      _
    $region21: #{tpu_custom_call.1} parent=1 // pred_fallthru
      _
    // Predicated region
    $region22: #{tpu_custom_call.1} parent=1 // pred_check
      _
    $region23: #{tpu_custom_call.1} parent=1 // pred_check_branch
      %60 = sbr.rel (0) target = $region25
    $region24: #{tpu_custom_call.1} parent=1 // pred_region
      %62 = vsyncadd [#allocation9], 0
      %s63 = sshll.u32 %s5, 4
      %s64 = int_to_ptr.hbm [resolvable:$true] %s63
      %s65 = sshll.u32 [#allocation8], 4
      %s66 = int_to_ptr.vmem [resolvable:$true] %s65
      %71 = dma.hbm_to_vmem [thread:$0]  %s64, 1024, %s66, [#allocation9], 64, 64, 4
    $region25: #{tpu_custom_call.1} parent=1 // pred_fallthru
      _
    // Predicated region
    $region26: #{tpu_custom_call.1} parent=1 // pred_check
      _
    $region27: #{tpu_custom_call.1} parent=1 // pred_check_branch
      %73 = sbr.rel (0) target = $region29
    $region28: #{tpu_custom_call.1} parent=1 // pred_region
      _
    $region29: #{tpu_custom_call.1} parent=1 // pred_fallthru
      _
    // Predicated region
    $region30: #{tpu_custom_call.1} parent=1 // pred_check
      _
    $region31: #{tpu_custom_call.1} parent=1 // pred_check_branch
      %75 = sbr.rel (0) target = $region33
    $region32: #{tpu_custom_call.1} parent=1 // pred_region
      %77 = dma.done [#allocation3], 2048
    $region33: #{tpu_custom_call.1} parent=1 // pred_fallthru
      _
    // Predicated region
    $region34: #{tpu_custom_call.1} parent=1 // pred_check
      _
    $region35: #{tpu_custom_call.1} parent=1 // pred_check_branch
      %79 = sbr.rel (0) target = $region37
    $region36: #{tpu_custom_call.1} parent=1 // pred_region
      %81 = dma.done [#allocation6], 8192
    $region37: #{tpu_custom_call.1} parent=1 // pred_fallthru
      _
    // Predicated region
    $region38: #{tpu_custom_call.1} parent=1 // pred_check
      _
    $region39: #{tpu_custom_call.1} parent=1 // pred_check_branch
      %83 = sbr.rel (0) target = $region41
    $region40: #{tpu_custom_call.1} parent=1 // pred_region
      %85 = dma.done [#allocation6], 2048
    $region41: #{tpu_custom_call.1} parent=1 // pred_fallthru
      _
    // Predicated region
    $region42: #{tpu_custom_call.1} parent=1 // pred_check
      _
    $region43: #{tpu_custom_call.1} parent=1 // pred_check_branch
      %87 = sbr.rel (0) target = $region45
    $region44: #{tpu_custom_call.1} parent=1 // pred_region
      %89 = dma.done [#allocation9], 1024
    $region45: #{tpu_custom_call.1} parent=1 // pred_fallthru
      _
    %v90 = vld [vmem:[#allocation2] sm:$0xff]
    %v91 = vld [vmem:[#allocation2 + $0x8] sm:$0xff]
    %v92 = vld [vmem:[#allocation2 + $0x10] sm:$0xff]
    %v93 = vld [vmem:[#allocation2 + $0x18] sm:$0xff]
    %v94 = vld [vmem:[#allocation2 + $0x20] sm:$0xff]
    %v95 = vld [vmem:[#allocation2 + $0x28] sm:$0xff]
    %v96 = vld [vmem:[#allocation2 + $0x30] sm:$0xff]
    %v97 = vld [vmem:[#allocation2 + $0x38] sm:$0xff]
    %v98 = vld [vmem:[#allocation2 + $0x40] sm:$0xff]
    %v99 = vld [vmem:[#allocation2 + $0x48] sm:$0xff]
    %v100 = vld [vmem:[#allocation2 + $0x50] sm:$0xff]
    %v101 = vld [vmem:[#allocation2 + $0x58] sm:$0xff]
    %v102 = vld [vmem:[#allocation2 + $0x60] sm:$0xff]
    %v103 = vld [vmem:[#allocation2 + $0x68] sm:$0xff]
    %v104 = vld [vmem:[#allocation2 + $0x70] sm:$0xff]
    %v105 = vld [vmem:[#allocation2 + $0x78] sm:$0xff]
    %v106 = vpack.c.bf16 %v98, %v90
    %v107 = vpack.c.bf16 %v99, %v91
    %v108 = vpack.c.bf16 %v100, %v92
    %v109 = vpack.c.bf16 %v101, %v93
    %v110 = vpack.c.bf16 %v102, %v94
    %v111 = vpack.c.bf16 %v103, %v95
    %v112 = vpack.c.bf16 %v104, %v96
    %v113 = vpack.c.bf16 %v105, %v97
    %v114 = vld [vmem:[#allocation5] sm:$0xf]
    %v115 = vld [vmem:[#allocation5 + $0x4] sm:$0xf]
    %v116 = vld [vmem:[#allocation5 + $0x8] sm:$0xf]
    %v117 = vld [vmem:[#allocation5 + $0xc] sm:$0xf]
    %v118 = vld [vmem:[#allocation5 + $0x10] sm:$0xf]
    %v119 = vld [vmem:[#allocation5 + $0x14] sm:$0xf]
    %v120 = vld [vmem:[#allocation5 + $0x18] sm:$0xf]
    %v121 = vld [vmem:[#allocation5 + $0x1c] sm:$0xf]
    %v122 = vld [vmem:[#allocation5 + $0x20] sm:$0xf]
    %v123 = vld [vmem:[#allocation5 + $0x24] sm:$0xf]
    %v124 = vld [vmem:[#allocation5 + $0x28] sm:$0xf]
    %v125 = vld [vmem:[#allocation5 + $0x2c] sm:$0xf]
    %v126 = vld [vmem:[#allocation5 + $0x30] sm:$0xf]
    %v127 = vld [vmem:[#allocation5 + $0x34] sm:$0xf]
    %v128 = vld [vmem:[#allocation5 + $0x38] sm:$0xf]
    %v129 = vld [vmem:[#allocation5 + $0x3c] sm:$0xf]
    %v130 = vld [vmem:[#allocation5 + $0x40] sm:$0xf]
    %v131 = vld [vmem:[#allocation5 + $0x44] sm:$0xf]
    %v132 = vld [vmem:[#allocation5 + $0x48] sm:$0xf]
    %v133 = vld [vmem:[#allocation5 + $0x4c] sm:$0xf]
    %v134 = vld [vmem:[#allocation5 + $0x50] sm:$0xf]
    %v135 = vld [vmem:[#allocation5 + $0x54] sm:$0xf]
    %v136 = vld [vmem:[#allocation5 + $0x58] sm:$0xf]
    %v137 = vld [vmem:[#allocation5 + $0x5c] sm:$0xf]
    %v138 = vld [vmem:[#allocation5 + $0x60] sm:$0xf]
    %v139 = vld [vmem:[#allocation5 + $0x64] sm:$0xf]
    %v140 = vld [vmem:[#allocation5 + $0x68] sm:$0xf]
    %v141 = vld [vmem:[#allocation5 + $0x6c] sm:$0xf]
    %v142 = vld [vmem:[#allocation5 + $0x70] sm:$0xf]
    %v143 = vld [vmem:[#allocation5 + $0x74] sm:$0xf]
    %v144 = vld [vmem:[#allocation5 + $0x78] sm:$0xf]
    %v145 = vld [vmem:[#allocation5 + $0x7c] sm:$0xf]
    %v146 = vld [vmem:[#allocation5 + $0x80] sm:$0xf]
    %v147 = vld [vmem:[#allocation5 + $0x84] sm:$0xf]
    %v148 = vld [vmem:[#allocation5 + $0x88] sm:$0xf]
    %v149 = vld [vmem:[#allocation5 + $0x8c] sm:$0xf]
    %v150 = vld [vmem:[#allocation5 + $0x90] sm:$0xf]
    %v151 = vld [vmem:[#allocation5 + $0x94] sm:$0xf]
    %v152 = vld [vmem:[#allocation5 + $0x98] sm:$0xf]
    %v153 = vld [vmem:[#allocation5 + $0x9c] sm:$0xf]
    %v154 = vld [vmem:[#allocation5 + $0xa0] sm:$0xf]
    %v155 = vld [vmem:[#allocation5 + $0xa4] sm:$0xf]
    %v156 = vld [vmem:[#allocation5 + $0xa8] sm:$0xf]
    %v157 = vld [vmem:[#allocation5 + $0xac] sm:$0xf]
    %v158 = vld [vmem:[#allocation5 + $0xb0] sm:$0xf]
    %v159 = vld [vmem:[#allocation5 + $0xb4] sm:$0xf]
    %v160 = vld [vmem:[#allocation5 + $0xb8] sm:$0xf]
    %v161 = vld [vmem:[#allocation5 + $0xbc] sm:$0xf]
    %v162 = vld [vmem:[#allocation5 + $0xc0] sm:$0xf]
    %v163 = vld [vmem:[#allocation5 + $0xc4] sm:$0xf]
    %v164 = vld [vmem:[#allocation5 + $0xc8] sm:$0xf]
    %v165 = vld [vmem:[#allocation5 + $0xcc] sm:$0xf]
    %v166 = vld [vmem:[#allocation5 + $0xd0] sm:$0xf]
    %v167 = vld [vmem:[#allocation5 + $0xd4] sm:$0xf]
    %v168 = vld [vmem:[#allocation5 + $0xd8] sm:$0xf]
    %v169 = vld [vmem:[#allocation5 + $0xdc] sm:$0xf]
    %v170 = vld [vmem:[#allocation5 + $0xe0] sm:$0xf]
    %v171 = vld [vmem:[#allocation5 + $0xe4] sm:$0xf]
    %v172 = vld [vmem:[#allocation5 + $0xe8] sm:$0xf]
    %v173 = vld [vmem:[#allocation5 + $0xec] sm:$0xf]
    %v174 = vld [vmem:[#allocation5 + $0xf0] sm:$0xf]
    %v175 = vld [vmem:[#allocation5 + $0xf4] sm:$0xf]
    %v176 = vld [vmem:[#allocation5 + $0xf8] sm:$0xf]
    %v177 = vld [vmem:[#allocation5 + $0xfc] sm:$0xf]
    %v178 = vld [vmem:[#allocation5 + $0x100] sm:$0xf]
    %v179 = vld [vmem:[#allocation5 + $0x104] sm:$0xf]
    %v180 = vld [vmem:[#allocation5 + $0x108] sm:$0xf]
    %v181 = vld [vmem:[#allocation5 + $0x10c] sm:$0xf]
    %v182 = vld [vmem:[#allocation5 + $0x110] sm:$0xf]
    %v183 = vld [vmem:[#allocation5 + $0x114] sm:$0xf]
    %v184 = vld [vmem:[#allocation5 + $0x118] sm:$0xf]
    %v185 = vld [vmem:[#allocation5 + $0x11c] sm:$0xf]
    %v186 = vld [vmem:[#allocation5 + $0x120] sm:$0xf]
    %v187 = vld [vmem:[#allocation5 + $0x124] sm:$0xf]
    %v188 = vld [vmem:[#allocation5 + $0x128] sm:$0xf]
    %v189 = vld [vmem:[#allocation5 + $0x12c] sm:$0xf]
    %v190 = vld [vmem:[#allocation5 + $0x130] sm:$0xf]
    %v191 = vld [vmem:[#allocation5 + $0x134] sm:$0xf]
    %v192 = vld [vmem:[#allocation5 + $0x138] sm:$0xf]
    %v193 = vld [vmem:[#allocation5 + $0x13c] sm:$0xf]
    %v194 = vld [vmem:[#allocation5 + $0x140] sm:$0xf]
    %v195 = vld [vmem:[#allocation5 + $0x144] sm:$0xf]
    %v196 = vld [vmem:[#allocation5 + $0x148] sm:$0xf]
    %v197 = vld [vmem:[#allocation5 + $0x14c] sm:$0xf]
    %v198 = vld [vmem:[#allocation5 + $0x150] sm:$0xf]
    %v199 = vld [vmem:[#allocation5 + $0x154] sm:$0xf]
    %v200 = vld [vmem:[#allocation5 + $0x158] sm:$0xf]
    %v201 = vld [vmem:[#allocation5 + $0x15c] sm:$0xf]
    %v202 = vld [vmem:[#allocation5 + $0x160] sm:$0xf]
    %v203 = vld [vmem:[#allocation5 + $0x164] sm:$0xf]
    %v204 = vld [vmem:[#allocation5 + $0x168] sm:$0xf]
    %v205 = vld [vmem:[#allocation5 + $0x16c] sm:$0xf]
    %v206 = vld [vmem:[#allocation5 + $0x170] sm:$0xf]
    %v207 = vld [vmem:[#allocation5 + $0x174] sm:$0xf]
    %v208 = vld [vmem:[#allocation5 + $0x178] sm:$0xf]
    %v209 = vld [vmem:[#allocation5 + $0x17c] sm:$0xf]
    %v210 = vld [vmem:[#allocation5 + $0x180] sm:$0xf]
    %v211 = vld [vmem:[#allocation5 + $0x184] sm:$0xf]
    %v212 = vld [vmem:[#allocation5 + $0x188] sm:$0xf]
    %v213 = vld [vmem:[#allocation5 + $0x18c] sm:$0xf]
    %v214 = vld [vmem:[#allocation5 + $0x190] sm:$0xf]
    %v215 = vld [vmem:[#allocation5 + $0x194] sm:$0xf]
    %v216 = vld [vmem:[#allocation5 + $0x198] sm:$0xf]
    %v217 = vld [vmem:[#allocation5 + $0x19c] sm:$0xf]
    %v218 = vld [vmem:[#allocation5 + $0x1a0] sm:$0xf]
    %v219 = vld [vmem:[#allocation5 + $0x1a4] sm:$0xf]
    %v220 = vld [vmem:[#allocation5 + $0x1a8] sm:$0xf]
    %v221 = vld [vmem:[#allocation5 + $0x1ac] sm:$0xf]
    %v222 = vld [vmem:[#allocation5 + $0x1b0] sm:$0xf]
    %v223 = vld [vmem:[#allocation5 + $0x1b4] sm:$0xf]
    %v224 = vld [vmem:[#allocation5 + $0x1b8] sm:$0xf]
    %v225 = vld [vmem:[#allocation5 + $0x1bc] sm:$0xf]
    %v226 = vld [vmem:[#allocation5 + $0x1c0] sm:$0xf]
    %v227 = vld [vmem:[#allocation5 + $0x1c4] sm:$0xf]
    %v228 = vld [vmem:[#allocation5 + $0x1c8] sm:$0xf]
    %v229 = vld [vmem:[#allocation5 + $0x1cc] sm:$0xf]
    %v230 = vld [vmem:[#allocation5 + $0x1d0] sm:$0xf]
    %v231 = vld [vmem:[#allocation5 + $0x1d4] sm:$0xf]
    %v232 = vld [vmem:[#allocation5 + $0x1d8] sm:$0xf]
    %v233 = vld [vmem:[#allocation5 + $0x1dc] sm:$0xf]
    %v234 = vld [vmem:[#allocation5 + $0x1e0] sm:$0xf]
    %v235 = vld [vmem:[#allocation5 + $0x1e4] sm:$0xf]
    %v236 = vld [vmem:[#allocation5 + $0x1e8] sm:$0xf]
    %v237 = vld [vmem:[#allocation5 + $0x1ec] sm:$0xf]
    %v238 = vld [vmem:[#allocation5 + $0x1f0] sm:$0xf]
    %v239 = vld [vmem:[#allocation5 + $0x1f4] sm:$0xf]
    %v240 = vld [vmem:[#allocation5 + $0x1f8] sm:$0xf]
    %v241 = vld [vmem:[#allocation5 + $0x1fc] sm:$0xf]
    %v242 = vld [vmem:[%s2] sm:$0x1]
    %v244 = vperm.slane %v242, 0
    %v374 = vunpack.c.l.b16 %v114
    %v375 = vunpack.c.l.b16 %v115
    %v376 = vunpack.c.l.b16 %v116
    %v377 = vunpack.c.l.b16 %v117
    %v378 = vunpack.c.l.b16 %v118
    %v379 = vunpack.c.l.b16 %v119
    %v380 = vunpack.c.l.b16 %v120
    %v381 = vunpack.c.l.b16 %v121
    %v382 = vunpack.c.l.b16 %v122
    %v383 = vunpack.c.l.b16 %v123
    %v384 = vunpack.c.l.b16 %v124
    %v385 = vunpack.c.l.b16 %v125
    %v386 = vunpack.c.l.b16 %v126
    %v387 = vunpack.c.l.b16 %v127
    %v388 = vunpack.c.l.b16 %v128
    %v389 = vunpack.c.l.b16 %v129
    %v390 = vunpack.c.l.b16 %v130
    %v391 = vunpack.c.l.b16 %v131
    %v392 = vunpack.c.l.b16 %v132
    %v393 = vunpack.c.l.b16 %v133
    %v394 = vunpack.c.l.b16 %v134
    %v395 = vunpack.c.l.b16 %v135
    %v396 = vunpack.c.l.b16 %v136
    %v397 = vunpack.c.l.b16 %v137
    %v398 = vunpack.c.l.b16 %v138
    %v399 = vunpack.c.l.b16 %v139
    %v400 = vunpack.c.l.b16 %v140
    %v401 = vunpack.c.l.b16 %v141
    %v402 = vunpack.c.l.b16 %v142
    %v403 = vunpack.c.l.b16 %v143
    %v404 = vunpack.c.l.b16 %v144
    %v405 = vunpack.c.l.b16 %v145
    %v406 = vunpack.c.l.b16 %v146
    %v407 = vunpack.c.l.b16 %v147
    %v408 = vunpack.c.l.b16 %v148
    %v409 = vunpack.c.l.b16 %v149
    %v410 = vunpack.c.l.b16 %v150
    %v411 = vunpack.c.l.b16 %v151
    %v412 = vunpack.c.l.b16 %v152
    %v413 = vunpack.c.l.b16 %v153
    %v414 = vunpack.c.l.b16 %v154
    %v415 = vunpack.c.l.b16 %v155
    %v416 = vunpack.c.l.b16 %v156
    %v417 = vunpack.c.l.b16 %v157
    %v418 = vunpack.c.l.b16 %v158
    %v419 = vunpack.c.l.b16 %v159
    %v420 = vunpack.c.l.b16 %v160
    %v421 = vunpack.c.l.b16 %v161
    %v422 = vunpack.c.l.b16 %v162
    %v423 = vunpack.c.l.b16 %v163
    %v424 = vunpack.c.l.b16 %v164
    %v425 = vunpack.c.l.b16 %v165
    %v426 = vunpack.c.l.b16 %v166
    %v427 = vunpack.c.l.b16 %v167
    %v428 = vunpack.c.l.b16 %v168
    %v429 = vunpack.c.l.b16 %v169
    %v430 = vunpack.c.l.b16 %v170
    %v431 = vunpack.c.l.b16 %v171
    %v432 = vunpack.c.l.b16 %v172
    %v433 = vunpack.c.l.b16 %v173
    %v434 = vunpack.c.l.b16 %v174
    %v435 = vunpack.c.l.b16 %v175
    %v436 = vunpack.c.l.b16 %v176
    %v437 = vunpack.c.l.b16 %v177
    %v438 = vunpack.c.l.b16 %v178
    %v439 = vunpack.c.l.b16 %v179
    %v440 = vunpack.c.l.b16 %v180
    %v441 = vunpack.c.l.b16 %v181
    %v442 = vunpack.c.l.b16 %v182
    %v443 = vunpack.c.l.b16 %v183
    %v444 = vunpack.c.l.b16 %v184
    %v445 = vunpack.c.l.b16 %v185
    %v446 = vunpack.c.l.b16 %v186
    %v447 = vunpack.c.l.b16 %v187
    %v448 = vunpack.c.l.b16 %v188
    %v449 = vunpack.c.l.b16 %v189
    %v450 = vunpack.c.l.b16 %v190
    %v451 = vunpack.c.l.b16 %v191
    %v452 = vunpack.c.l.b16 %v192
    %v453 = vunpack.c.l.b16 %v193
    %v454 = vunpack.c.l.b16 %v194
    %v455 = vunpack.c.l.b16 %v195
    %v456 = vunpack.c.l.b16 %v196
    %v457 = vunpack.c.l.b16 %v197
    %v458 = vunpack.c.l.b16 %v198
    %v459 = vunpack.c.l.b16 %v199
    %v460 = vunpack.c.l.b16 %v200
    %v461 = vunpack.c.l.b16 %v201
    %v462 = vunpack.c.l.b16 %v202
    %v463 = vunpack.c.l.b16 %v203
    %v464 = vunpack.c.l.b16 %v204
    %v465 = vunpack.c.l.b16 %v205
    %v466 = vunpack.c.l.b16 %v206
    %v467 = vunpack.c.l.b16 %v207
    %v468 = vunpack.c.l.b16 %v208
    %v469 = vunpack.c.l.b16 %v209
    %v470 = vunpack.c.l.b16 %v210
    %v471 = vunpack.c.l.b16 %v211
    %v472 = vunpack.c.l.b16 %v212
    %v473 = vunpack.c.l.b16 %v213
    %v474 = vunpack.c.l.b16 %v214
    %v475 = vunpack.c.l.b16 %v215
    %v476 = vunpack.c.l.b16 %v216
    %v477 = vunpack.c.l.b16 %v217
    %v478 = vunpack.c.l.b16 %v218
    %v479 = vunpack.c.l.b16 %v219
    %v480 = vunpack.c.l.b16 %v220
    %v481 = vunpack.c.l.b16 %v221
    %v482 = vunpack.c.l.b16 %v222
    %v483 = vunpack.c.l.b16 %v223
    %v484 = vunpack.c.l.b16 %v224
    %v485 = vunpack.c.l.b16 %v225
    %v486 = vunpack.c.l.b16 %v226
    %v487 = vunpack.c.l.b16 %v227
    %v488 = vunpack.c.l.b16 %v228
    %v489 = vunpack.c.l.b16 %v229
    %v490 = vunpack.c.l.b16 %v230
    %v491 = vunpack.c.l.b16 %v231
    %v492 = vunpack.c.l.b16 %v232
    %v493 = vunpack.c.l.b16 %v233
    %v494 = vunpack.c.l.b16 %v234
    %v495 = vunpack.c.l.b16 %v235
    %v496 = vunpack.c.l.b16 %v236
    %v497 = vunpack.c.l.b16 %v237
    %v498 = vunpack.c.l.b16 %v238
    %v499 = vunpack.c.l.b16 %v239
    %v500 = vunpack.c.l.b16 %v240
    %v501 = vunpack.c.l.b16 %v241
    %v502 = vpack.c.b16 %v375, %v374
    %v503 = vpack.c.b16 %v377, %v376
    %v504 = vpack.c.b16 %v379, %v378
    %v505 = vpack.c.b16 %v381, %v380
    %v506 = vpack.c.b16 %v383, %v382
    %v507 = vpack.c.b16 %v385, %v384
    %v508 = vpack.c.b16 %v387, %v386
    %v509 = vpack.c.b16 %v389, %v388
    %v510 = vpack.c.b16 %v391, %v390
    %v511 = vpack.c.b16 %v393, %v392
    %v512 = vpack.c.b16 %v395, %v394
    %v513 = vpack.c.b16 %v397, %v396
    %v514 = vpack.c.b16 %v399, %v398
    %v515 = vpack.c.b16 %v401, %v400
    %v516 = vpack.c.b16 %v403, %v402
    %v517 = vpack.c.b16 %v405, %v404
    %v518 = vpack.c.b16 %v407, %v406
    %v519 = vpack.c.b16 %v409, %v408
    %v520 = vpack.c.b16 %v411, %v410
    %v521 = vpack.c.b16 %v413, %v412
    %v522 = vpack.c.b16 %v415, %v414
    %v523 = vpack.c.b16 %v417, %v416
    %v524 = vpack.c.b16 %v419, %v418
    %v525 = vpack.c.b16 %v421, %v420
    %v526 = vpack.c.b16 %v423, %v422
    %v527 = vpack.c.b16 %v425, %v424
    %v528 = vpack.c.b16 %v427, %v426
    %v529 = vpack.c.b16 %v429, %v428
    %v530 = vpack.c.b16 %v431, %v430
    %v531 = vpack.c.b16 %v433, %v432
    %v532 = vpack.c.b16 %v435, %v434
    %v533 = vpack.c.b16 %v437, %v436
    %v534 = vpack.c.b16 %v439, %v438
    %v535 = vpack.c.b16 %v441, %v440
    %v536 = vpack.c.b16 %v443, %v442
    %v537 = vpack.c.b16 %v445, %v444
    %v538 = vpack.c.b16 %v447, %v446
    %v539 = vpack.c.b16 %v449, %v448
    %v540 = vpack.c.b16 %v451, %v450
    %v541 = vpack.c.b16 %v453, %v452
    %v542 = vpack.c.b16 %v455, %v454
    %v543 = vpack.c.b16 %v457, %v456
    %v544 = vpack.c.b16 %v459, %v458
    %v545 = vpack.c.b16 %v461, %v460
    %v546 = vpack.c.b16 %v463, %v462
    %v547 = vpack.c.b16 %v465, %v464
    %v548 = vpack.c.b16 %v467, %v466
    %v549 = vpack.c.b16 %v469, %v468
    %v550 = vpack.c.b16 %v471, %v470
    %v551 = vpack.c.b16 %v473, %v472
    %v552 = vpack.c.b16 %v475, %v474
    %v553 = vpack.c.b16 %v477, %v476
    %v554 = vpack.c.b16 %v479, %v478
    %v555 = vpack.c.b16 %v481, %v480
    %v556 = vpack.c.b16 %v483, %v482
    %v557 = vpack.c.b16 %v485, %v484
    %v558 = vpack.c.b16 %v487, %v486
    %v559 = vpack.c.b16 %v489, %v488
    %v560 = vpack.c.b16 %v491, %v490
    %v561 = vpack.c.b16 %v493, %v492
    %v562 = vpack.c.b16 %v495, %v494
    %v563 = vpack.c.b16 %v497, %v496
    %v564 = vpack.c.b16 %v499, %v498
    %v565 = vpack.c.b16 %v501, %v500
    %630 = vmatpush.bf16.msra.mxu0 %v509
    %631 = vmatpush.bf16.msra.mxu0 %v508
    %632 = vmatpush.bf16.msra.mxu0 %v507
    %633 = vmatpush.bf16.msra.mxu0 %v506
    %634 = vmatpush.bf16.msra.mxu0 %v505
    %635 = vmatpush.bf16.msra.mxu0 %v504
    %636 = vmatpush.bf16.msra.mxu0 %v503
    %637 = vmatpush.bf16.msra.mxu0 %v502
    %638 = vmatmul.bf16.gmra.mxu0 %v106
    %v639 = vpop.f32.mrf.mxu0
    %v640 = vadd.f32 %v244, %v639
    %v641 = vpop.f32.mrf.mxu0
    %v642 = vadd.f32 %v244, %v641
    %643 = vdwg.mxu0
    %644 = vmatpush.bf16.msra.mxu0 %v517
    %645 = vmatpush.bf16.msra.mxu0 %v516
    %646 = vmatpush.bf16.msra.mxu0 %v515
    %647 = vmatpush.bf16.msra.mxu0 %v514
    %648 = vmatpush.bf16.msra.mxu0 %v513
    %649 = vmatpush.bf16.msra.mxu0 %v512
    %650 = vmatpush.bf16.msra.mxu0 %v511
    %651 = vmatpush.bf16.msra.mxu0 %v510
    %652 = vmatmul.bf16.gmra.mxu0 %v107
    %v653 = vpop.f32.mrf.mxu0
    %v654 = vadd.f32 %v640, %v653
    %v655 = vpop.f32.mrf.mxu0
    %v656 = vadd.f32 %v642, %v655
    %657 = vdwg.mxu0
    %658 = vmatpush.bf16.msra.mxu0 %v525
    %659 = vmatpush.bf16.msra.mxu0 %v524
    %660 = vmatpush.bf16.msra.mxu0 %v523
    %661 = vmatpush.bf16.msra.mxu0 %v522
    %662 = vmatpush.bf16.msra.mxu0 %v521
    %663 = vmatpush.bf16.msra.mxu0 %v520
    %664 = vmatpush.bf16.msra.mxu0 %v519
    %665 = vmatpush.bf16.msra.mxu0 %v518
    %666 = vmatmul.bf16.gmra.mxu0 %v108
    %v667 = vpop.f32.mrf.mxu0
    %v668 = vadd.f32 %v654, %v667
    %v669 = vpop.f32.mrf.mxu0
    %v670 = vadd.f32 %v656, %v669
    %671 = vdwg.mxu0
    %672 = vmatpush.bf16.msra.mxu0 %v533
    %673 = vmatpush.bf16.msra.mxu0 %v532
    %674 = vmatpush.bf16.msra.mxu0 %v531
    %675 = vmatpush.bf16.msra.mxu0 %v530
    %676 = vmatpush.bf16.msra.mxu0 %v529
    %677 = vmatpush.bf16.msra.mxu0 %v528
    %678 = vmatpush.bf16.msra.mxu0 %v527
    %679 = vmatpush.bf16.msra.mxu0 %v526
    %680 = vmatmul.bf16.gmra.mxu0 %v109
    %v681 = vpop.f32.mrf.mxu0
    %v682 = vadd.f32 %v668, %v681
    %v683 = vpop.f32.mrf.mxu0
    %v684 = vadd.f32 %v670, %v683
    %685 = vdwg.mxu0
    %686 = vmatpush.bf16.msra.mxu0 %v541
    %687 = vmatpush.bf16.msra.mxu0 %v540
    %688 = vmatpush.bf16.msra.mxu0 %v539
    %689 = vmatpush.bf16.msra.mxu0 %v538
    %690 = vmatpush.bf16.msra.mxu0 %v537
    %691 = vmatpush.bf16.msra.mxu0 %v536
    %692 = vmatpush.bf16.msra.mxu0 %v535
    %693 = vmatpush.bf16.msra.mxu0 %v534
    %694 = vmatmul.bf16.gmra.mxu0 %v110
    %v695 = vpop.f32.mrf.mxu0
    %v696 = vadd.f32 %v682, %v695
    %v697 = vpop.f32.mrf.mxu0
    %v698 = vadd.f32 %v684, %v697
    %699 = vdwg.mxu0
    %700 = vmatpush.bf16.msra.mxu0 %v549
    %701 = vmatpush.bf16.msra.mxu0 %v548
    %702 = vmatpush.bf16.msra.mxu0 %v547
    %703 = vmatpush.bf16.msra.mxu0 %v546
    %704 = vmatpush.bf16.msra.mxu0 %v545
    %705 = vmatpush.bf16.msra.mxu0 %v544
    %706 = vmatpush.bf16.msra.mxu0 %v543
    %707 = vmatpush.bf16.msra.mxu0 %v542
    %708 = vmatmul.bf16.gmra.mxu0 %v111
    %v709 = vpop.f32.mrf.mxu0
    %v710 = vadd.f32 %v696, %v709
    %v711 = vpop.f32.mrf.mxu0
    %v712 = vadd.f32 %v698, %v711
    %713 = vdwg.mxu0
    %714 = vmatpush.bf16.msra.mxu0 %v557
    %715 = vmatpush.bf16.msra.mxu0 %v556
    %716 = vmatpush.bf16.msra.mxu0 %v555
    %717 = vmatpush.bf16.msra.mxu0 %v554
    %718 = vmatpush.bf16.msra.mxu0 %v553
    %719 = vmatpush.bf16.msra.mxu0 %v552
    %720 = vmatpush.bf16.msra.mxu0 %v551
    %721 = vmatpush.bf16.msra.mxu0 %v550
    %722 = vmatmul.bf16.gmra.mxu0 %v112
    %v723 = vpop.f32.mrf.mxu0
    %v724 = vadd.f32 %v710, %v723
    %v725 = vpop.f32.mrf.mxu0
    %v726 = vadd.f32 %v712, %v725
    %727 = vdwg.mxu0
    %728 = vmatpush.bf16.msra.mxu0 %v565
    %729 = vmatpush.bf16.msra.mxu0 %v564
    %730 = vmatpush.bf16.msra.mxu0 %v563
    %731 = vmatpush.bf16.msra.mxu0 %v562
    %732 = vmatpush.bf16.msra.mxu0 %v561
    %733 = vmatpush.bf16.msra.mxu0 %v560
    %734 = vmatpush.bf16.msra.mxu0 %v559
    %735 = vmatpush.bf16.msra.mxu0 %v558
    %736 = vmatmul.bf16.gmra.mxu0 %v113
    %v737 = vpop.f32.mrf.mxu0
    %v738 = vadd.f32 %v724, %v737
    %v739 = vpop.f32.mrf.mxu0
    %v740 = vadd.f32 %v726, %v739
    %741 = vdwg.mxu0
    %v742 = vmax.f32 %v738, 0.0
    %v743 = vmax.f32 %v740, 0.0
    %v744 = vpack.c.bf16 %v743, %v742
    %v745 = vld [vmem:[#allocation7] sm:$0xf]
    %v746 = vld [vmem:[#allocation7 + $0x4] sm:$0xf]
    %v747 = vld [vmem:[#allocation7 + $0x8] sm:$0xf]
    %v748 = vld [vmem:[#allocation7 + $0xc] sm:$0xf]
    %v749 = vld [vmem:[#allocation7 + $0x10] sm:$0xf]
    %v750 = vld [vmem:[#allocation7 + $0x14] sm:$0xf]
    %v751 = vld [vmem:[#allocation7 + $0x18] sm:$0xf]
    %v752 = vld [vmem:[#allocation7 + $0x1c] sm:$0xf]
    %v753 = vld [vmem:[#allocation7 + $0x20] sm:$0xf]
    %v754 = vld [vmem:[#allocation7 + $0x24] sm:$0xf]
    %v755 = vld [vmem:[#allocation7 + $0x28] sm:$0xf]
    %v756 = vld [vmem:[#allocation7 + $0x2c] sm:$0xf]
    %v757 = vld [vmem:[#allocation7 + $0x30] sm:$0xf]
    %v758 = vld [vmem:[#allocation7 + $0x34] sm:$0xf]
    %v759 = vld [vmem:[#allocation7 + $0x38] sm:$0xf]
    %v760 = vld [vmem:[#allocation7 + $0x3c] sm:$0xf]
    %v761 = vld [vmem:[%s4] sm:$0x1]
    %v763 = vperm.slane %v761, 0
    %v781 = vunpack.c.l.b16 %v745
    %v782 = vunpack.c.l.b16 %v746
    %v783 = vunpack.c.l.b16 %v747
    %v784 = vunpack.c.l.b16 %v748
    %v785 = vunpack.c.l.b16 %v749
    %v786 = vunpack.c.l.b16 %v750
    %v787 = vunpack.c.l.b16 %v751
    %v788 = vunpack.c.l.b16 %v752
    %v789 = vunpack.c.l.b16 %v753
    %v790 = vunpack.c.l.b16 %v754
    %v791 = vunpack.c.l.b16 %v755
    %v792 = vunpack.c.l.b16 %v756
    %v793 = vunpack.c.l.b16 %v757
    %v794 = vunpack.c.l.b16 %v758
    %v795 = vunpack.c.l.b16 %v759
    %v796 = vunpack.c.l.b16 %v760
    %v797 = vpack.c.b16 %v782, %v781
    %v798 = vpack.c.b16 %v784, %v783
    %v799 = vpack.c.b16 %v786, %v785
    %v800 = vpack.c.b16 %v788, %v787
    %v801 = vpack.c.b16 %v790, %v789
    %v802 = vpack.c.b16 %v792, %v791
    %v803 = vpack.c.b16 %v794, %v793
    %v804 = vpack.c.b16 %v796, %v795
    %813 = vmatpush.bf16.msra.mxu0 %v804
    %814 = vmatpush.bf16.msra.mxu0 %v803
    %815 = vmatpush.bf16.msra.mxu0 %v802
    %816 = vmatpush.bf16.msra.mxu0 %v801
    %817 = vmatpush.bf16.msra.mxu0 %v800
    %818 = vmatpush.bf16.msra.mxu0 %v799
    %819 = vmatpush.bf16.msra.mxu0 %v798
    %820 = vmatpush.bf16.msra.mxu0 %v797
    %821 = vmatmul.bf16.gmra.mxu0 %v744
    %v822 = vpop.f32.mrf.mxu0
    %v823 = vadd.f32 %v763, %v822
    %v824 = vpop.f32.mrf.mxu0
    %v825 = vadd.f32 %v763, %v824
    %826 = vdwg.mxu0
    %v827 = vmax.f32 %v823, 0.0
    %v828 = vmax.f32 %v825, 0.0
    %v829 = vpack.c.bf16 %v828, %v827
    %s830 = scalar_lea.vmem [#allocation7], 64
    %v831 = vld [vmem:[%s830] sm:$0xf]
    %v832 = vld [vmem:[%s830 + $0x4] sm:$0xf]
    %v833 = vld [vmem:[%s830 + $0x8] sm:$0xf]
    %v834 = vld [vmem:[%s830 + $0xc] sm:$0xf]
    %v835 = vld [vmem:[%s830 + $0x10] sm:$0xf]
    %v836 = vld [vmem:[%s830 + $0x14] sm:$0xf]
    %v837 = vld [vmem:[%s830 + $0x18] sm:$0xf]
    %v838 = vld [vmem:[%s830 + $0x1c] sm:$0xf]
    %v839 = vld [vmem:[%s830 + $0x20] sm:$0xf]
    %v840 = vld [vmem:[%s830 + $0x24] sm:$0xf]
    %v841 = vld [vmem:[%s830 + $0x28] sm:$0xf]
    %v842 = vld [vmem:[%s830 + $0x2c] sm:$0xf]
    %v843 = vld [vmem:[%s830 + $0x30] sm:$0xf]
    %v844 = vld [vmem:[%s830 + $0x34] sm:$0xf]
    %v845 = vld [vmem:[%s830 + $0x38] sm:$0xf]
    %v846 = vld [vmem:[%s830 + $0x3c] sm:$0xf]
    %s847 = scalar_lea.vmem %s4, 1
    %v848 = vld [vmem:[%s847] sm:$0x1]
    %v850 = vperm.slane %v848, 0
    %v868 = vunpack.c.l.b16 %v831
    %v869 = vunpack.c.l.b16 %v832
    %v870 = vunpack.c.l.b16 %v833
    %v871 = vunpack.c.l.b16 %v834
    %v872 = vunpack.c.l.b16 %v835
    %v873 = vunpack.c.l.b16 %v836
    %v874 = vunpack.c.l.b16 %v837
    %v875 = vunpack.c.l.b16 %v838
    %v876 = vunpack.c.l.b16 %v839
    %v877 = vunpack.c.l.b16 %v840
    %v878 = vunpack.c.l.b16 %v841
    %v879 = vunpack.c.l.b16 %v842
    %v880 = vunpack.c.l.b16 %v843
    %v881 = vunpack.c.l.b16 %v844
    %v882 = vunpack.c.l.b16 %v845
    %v883 = vunpack.c.l.b16 %v846
    %v884 = vpack.c.b16 %v869, %v868
    %v885 = vpack.c.b16 %v871, %v870
    %v886 = vpack.c.b16 %v873, %v872
    %v887 = vpack.c.b16 %v875, %v874
    %v888 = vpack.c.b16 %v877, %v876
    %v889 = vpack.c.b16 %v879, %v878
    %v890 = vpack.c.b16 %v881, %v880
    %v891 = vpack.c.b16 %v883, %v882
    %900 = vmatpush.bf16.msra.mxu0 %v891
    %901 = vmatpush.bf16.msra.mxu0 %v890
    %902 = vmatpush.bf16.msra.mxu0 %v889
    %903 = vmatpush.bf16.msra.mxu0 %v888
    %904 = vmatpush.bf16.msra.mxu0 %v887
    %905 = vmatpush.bf16.msra.mxu0 %v886
    %906 = vmatpush.bf16.msra.mxu0 %v885
    %907 = vmatpush.bf16.msra.mxu0 %v884
    %908 = vmatmul.bf16.gmra.mxu0 %v829
    %v909 = vpop.f32.mrf.mxu0
    %v910 = vadd.f32 %v850, %v909
    %v911 = vpop.f32.mrf.mxu0
    %v912 = vadd.f32 %v850, %v911
    %913 = vdwg.mxu0
    %v914 = vmax.f32 %v910, 0.0
    %v915 = vmax.f32 %v912, 0.0
    %v916 = vpack.c.bf16 %v915, %v914
    %v917 = vld [vmem:[#allocation8] sm:$0xf]
    %v918 = vld [vmem:[#allocation8 + $0x4] sm:$0xf]
    %v919 = vld [vmem:[#allocation8 + $0x8] sm:$0xf]
    %v920 = vld [vmem:[#allocation8 + $0xc] sm:$0xf]
    %v921 = vld [vmem:[#allocation8 + $0x10] sm:$0xf]
    %v922 = vld [vmem:[#allocation8 + $0x14] sm:$0xf]
    %v923 = vld [vmem:[#allocation8 + $0x18] sm:$0xf]
    %v924 = vld [vmem:[#allocation8 + $0x1c] sm:$0xf]
    %v925 = vld [vmem:[#allocation8 + $0x20] sm:$0xf]
    %v926 = vld [vmem:[#allocation8 + $0x24] sm:$0xf]
    %v927 = vld [vmem:[#allocation8 + $0x28] sm:$0xf]
    %v928 = vld [vmem:[#allocation8 + $0x2c] sm:$0xf]
    %v929 = vld [vmem:[#allocation8 + $0x30] sm:$0xf]
    %v930 = vld [vmem:[#allocation8 + $0x34] sm:$0xf]
    %v931 = vld [vmem:[#allocation8 + $0x38] sm:$0xf]
    %v932 = vld [vmem:[#allocation8 + $0x3c] sm:$0xf]
    %v933 = vld [vmem:[%s6] sm:$0x1]
    %v935 = vperm.slane %v933, 0
    %v953 = vunpack.c.l.b16 %v917
    %v954 = vunpack.c.l.b16 %v918
    %v955 = vunpack.c.l.b16 %v919
    %v956 = vunpack.c.l.b16 %v920
    %v957 = vunpack.c.l.b16 %v921
    %v958 = vunpack.c.l.b16 %v922
    %v959 = vunpack.c.l.b16 %v923
    %v960 = vunpack.c.l.b16 %v924
    %v961 = vunpack.c.l.b16 %v925
    %v962 = vunpack.c.l.b16 %v926
    %v963 = vunpack.c.l.b16 %v927
    %v964 = vunpack.c.l.b16 %v928
    %v965 = vunpack.c.l.b16 %v929
    %v966 = vunpack.c.l.b16 %v930
    %v967 = vunpack.c.l.b16 %v931
    %v968 = vunpack.c.l.b16 %v932
    %v969 = vpack.c.b16 %v954, %v953
    %v970 = vpack.c.b16 %v956, %v955
    %v971 = vpack.c.b16 %v958, %v957
    %v972 = vpack.c.b16 %v960, %v959
    %v973 = vpack.c.b16 %v962, %v961
    %v974 = vpack.c.b16 %v964, %v963
    %v975 = vpack.c.b16 %v966, %v965
    %v976 = vpack.c.b16 %v968, %v967
    %985 = vmatpush.bf16.msra.mxu0 %v976
    %986 = vmatpush.bf16.msra.mxu0 %v975
    %987 = vmatpush.bf16.msra.mxu0 %v974
    %988 = vmatpush.bf16.msra.mxu0 %v973
    %989 = vmatpush.bf16.msra.mxu0 %v972
    %990 = vmatpush.bf16.msra.mxu0 %v971
    %991 = vmatpush.bf16.msra.mxu0 %v970
    %992 = vmatpush.bf16.msra.mxu0 %v969
    %993 = vmatmul.bf16.gmra.mxu0 %v916
    %v994 = vpop.f32.mrf.mxu0
    %v995 = vadd.f32 %v935, %v994
    %v996 = vpop.f32.mrf.mxu0
    %v997 = vadd.f32 %v935, %v996
    %998 = vdwg.mxu0
    %999 = vst [vmem:[#allocation10] sm:$0xff] %v995
    %1000 = vst [vmem:[#allocation10 + $0x8] sm:$0xff] %v997
    // Predicated region
    $region46: #{tpu_custom_call.1} parent=1 // pred_check
      _
    $region47: #{tpu_custom_call.1} parent=1 // pred_check_branch
      %1002 = sbr.rel (0) target = $region49
    $region48: #{tpu_custom_call.1} parent=1 // pred_region
      %1004 = vsyncadd [#allocation4], 0
      %s1005 = sshll.u32 [#allocation10], 4
      %s1006 = int_to_ptr.vmem [resolvable:$true] %s1005
      %s1007 = sshll.u32 %s7, 4
      %s1008 = int_to_ptr.hbm [resolvable:$true] %s1007
      %1013 = dma.vmem_to_hbm [thread:$0]  %s1006, 256, %s1008, [#allocation4], 128, 128, 8
    $region49: #{tpu_custom_call.1} parent=1 // pred_fallthru
      _
    // Predicated region
    $region50: #{tpu_custom_call.1} parent=1 // pred_check
      _
    $region51: #{tpu_custom_call.1} parent=1 // pred_check_branch
      %1015 = sbr.rel (0) target = $region53
    $region52: #{tpu_custom_call.1} parent=1 // pred_region
      %1017 = dma.done [#allocation4], 256
    $region53: #{tpu_custom_call.1} parent=1 // pred_fallthru
      _
    %1018 = vsyncpa [#allocation3], 1
    %1019 = vsyncpa [#allocation6], 1
    %1020 = vsyncpa [#allocation9], 1
    %1021 = vsyncpa [#allocation4], 1

</llo_original>
